<compile_context>
chip_gen: v7x
topology: tpu7x:2x2x1
jax: 0.10.0
libtpu: 0.0.40
codegen_flags: <defaults>
</compile_context>

<pallas_src>
import math
import functools

import jax
import jax.numpy as jnp
from jax.experimental import pallas as pl
from jax.experimental.pallas import tpu as pltpu

DROPOUT_P = 0.05  # matches `dropout = 0.05` in the reference script


def make_positional_encoding(d_model, max_len=5000, dtype=jnp.float32):
    """Deterministic buffer identical to PositionalEncoding.__init__: shape (max_len, 1, d_model)."""
    position = jnp.arange(0, max_len, dtype=jnp.float32)[:, None]
    div_term = jnp.exp(
        jnp.arange(0, d_model, 2, dtype=jnp.float32) * (-math.log(10000.0) / d_model)
    )
    pe = jnp.zeros((max_len, d_model), dtype=jnp.float32)
    pe = pe.at[:, 0::2].set(jnp.sin(position * div_term))
    pe = pe.at[:, 1::2].set(jnp.cos(position * div_term))
    return pe[:, None, :].astype(dtype)  # unsqueeze(0).transpose(0, 1)


def _add_pe_kernel(x_ref, pe_ref, o_ref):
    # Pure streaming add: (1, lane) pe row broadcast over the (tile_rows, lane) block.
    o_ref[...] = x_ref[...] + pe_ref[...]


def _add_pe_dropout_hw_kernel(seed_ref, x_ref, pe_ref, o_ref, *, threshold, scale):
    # TPU path: add PE, then inverted dropout via integer-threshold compare on
    # raw hardware-PRNG bits (keep with prob ~ 1 - p). Per-block seed so every
    # grid step is independent -> megacore-shardable.
    pltpu.prng_seed(seed_ref[0] + pl.program_id(0))
    y = x_ref[...] + pe_ref[...]
    bits = pltpu.bitcast(pltpu.prng_random_bits(y.shape), jnp.uint32)
    keep = bits >= jnp.uint32(threshold)
    yk = y.astype(jnp.float32) * scale  # scale in f32, single cast at store
    o_ref[...] = jnp.where(keep, yk, jnp.zeros_like(yk)).astype(o_ref.dtype)


def _add_pe_dropout_hash_kernel(seed_ref, x_ref, pe_ref, o_ref, *,
                                threshold, scale, tile_rows, lane):
    # Portable path (interpret / non-TPU backends): counter-based PRNG
    # (murmur3 finalizer) keyed on (seed, global element index). Plain VPU
    # integer ops only, so it lowers everywhere.
    y = x_ref[...] + pe_ref[...]
    row0 = (pl.program_id(0) * tile_rows).astype(jnp.uint32)
    rows_i = jax.lax.broadcasted_iota(jnp.int32, y.shape, 0).astype(jnp.uint32) + row0
    cols_i = jax.lax.broadcasted_iota(jnp.int32, y.shape, 1).astype(jnp.uint32)
    h = rows_i * jnp.uint32(lane) + cols_i
    h = h * jnp.uint32(0x9E3779B1) + seed_ref[0].astype(jnp.uint32)
    h = h ^ (h >> 16)
    h = h * jnp.uint32(0x85EBCA6B)
    h = h ^ (h >> 13)
    h = h * jnp.uint32(0xC2B2AE35)
    h = h ^ (h >> 16)
    keep = h >= jnp.uint32(threshold)
    yk = y.astype(jnp.float32) * scale
    o_ref[...] = jnp.where(keep, yk, jnp.zeros_like(yk)).astype(o_ref.dtype)


def _lane_dense_view(x, pe_row):
    """Reshape (S, B, D) -> (rows, lane) with lane = lcm(D, 128) when the total
    element count folds evenly; otherwise lane = D. Returns (x2d, pe2d, rows, lane)."""
    S, B, D = x.shape
    total = S * B * D
    lane = math.lcm(D, 128)
    if lane <= total and total % lane == 0:
        rows = total // lane
        pe2d = jnp.tile(pe_row, lane // D).reshape(1, lane)
    else:
        lane = D  # general fallback (possibly masked stores if D % 128 != 0)
        rows = S * B
        pe2d = pe_row.reshape(1, lane)
    return x.reshape(rows, lane), pe2d, rows, lane


def positional_encoding_forward(x, pe, *, p=DROPOUT_P, training=False, seed=0,
                                tile_rows=None, use_hw_prng=None):
    """x: (S, B, D); pe: (max_len, 1, D). Returns dropout(x + pe[0, :])."""
    S, B, D = x.shape
    pe_row = pe[0, 0].astype(x.dtype)  # (D,) — same broadcast source as torch's pe[0, :]
    x2d, pe2d, rows, lane = _lane_dense_view(x, pe_row)

    itemsize = jnp.dtype(x.dtype).itemsize
    sub = max(8, 8 * (4 // itemsize))  # sublane granularity: 8 f32 / 16 bf16 / 32 int8
    if tile_rows is None:
        tile_rows = max(1, (4 << 20) // (lane * itemsize))  # ~4 MiB per block
    tile_rows = min(tile_rows, rows)
    if rows >= sub:
        tile_rows = max(sub, (tile_rows // sub) * sub)
        # Guarantee >= 2 blocks when possible: lets the "parallel" axis shard
        # across both v7x TensorCores and keeps the DMA pipeline overlapped.
        if rows >= 2 * sub and tile_rows >= rows:
            tile_rows = max(sub, ((rows // 2) // sub) * sub)
    else:
        tile_rows = rows  # tiny case: single block equal to full row extent

    # Ragged last block is fine: Pallas masks out-of-bounds writes, no padding
    # pass over HBM is needed and out_shape is exactly (rows, lane).
    grid = (pl.cdiv(rows, tile_rows),)
    # index_maps take (grid_idx, *scalar_prefetch_refs); *_ swallows the optional seed ref.
    x_spec = pl.BlockSpec((tile_rows, lane), lambda i, *_: (i, 0))
    pe_spec = pl.BlockSpec((1, lane), lambda i, *_: (0, 0))  # constant index -> stays resident
    out_spec = pl.BlockSpec((tile_rows, lane), lambda i, *_: (i, 0))
    out_shape = jax.ShapeDtypeStruct((rows, lane), x.dtype)
    compiler_params = pltpu.CompilerParams(
        dimension_semantics=("parallel",),   # independent blocks in both modes
        vmem_limit_bytes=48 << 20,           # fits v7x (64 MiB), lifts v5e default
    )

    if not training or p <= 0.0:
        out2d = pl.pallas_call(
            _add_pe_kernel,
            out_shape=out_shape,
            grid_spec=pltpu.PrefetchScalarGridSpec(
                num_scalar_prefetch=0,
                grid=grid,
                in_specs=[x_spec, pe_spec],
                out_specs=out_spec,
            ),
            compiler_params=compiler_params,
        )(x2d, pe2d)
    else:
        # TODO(synk): dropout mask uses the TPU hardware PRNG (or a hash PRNG off-TPU);
        # it cannot bit-match torch's RNG stream.
        if use_hw_prng is None:
            use_hw_prng = jax.default_backend() == "tpu"
        seed_arr = jnp.array([seed], dtype=jnp.int32)
        threshold = min(int(round(p * (1 << 32))), (1 << 32) - 1)
        scale = 1.0 / (1.0 - p)
        if use_hw_prng:
            kernel = functools.partial(_add_pe_dropout_hw_kernel,
                                       threshold=threshold, scale=scale)
        else:
            kernel = functools.partial(_add_pe_dropout_hash_kernel,
                                       threshold=threshold, scale=scale,
                                       tile_rows=tile_rows, lane=lane)
        out2d = pl.pallas_call(
            kernel,
            out_shape=out_shape,
            grid_spec=pltpu.PrefetchScalarGridSpec(
                num_scalar_prefetch=1,
                grid=grid,
                in_specs=[x_spec, pe_spec],
                out_specs=out_spec,
            ),
            compiler_params=compiler_params,
        )(seed_arr, x2d, pe2d)

    return out2d.reshape(S, B, D)


if __name__ == "__main__":
    # Small shapes consistent with a transformer PE: seq=8, batch=2, d_model=32.
    S, B, D = 8, 2, 32
    key = jax.random.PRNGKey(0)
    x = jax.random.normal(key, (S, B, D), dtype=jnp.float32)
    pe = make_positional_encoding(D, max_len=64)
    ref = x + pe[0]  # pure-JAX reference of the PyTorch forward (eval mode)

    # Eval mode (dropout == identity), lane-folded (lcm(32,128)=128) path.
    out = jax.block_until_ready(positional_encoding_forward(x, pe, training=False))
    assert out.shape == (S, B, D) and out.dtype == jnp.float32
    assert jnp.allclose(out, ref, atol=1e-6), "eval-mode mismatch vs reference"

    # lcm-fold path for a d_model that divides neither into nor by 128: D=48 -> lane=384.
    D2 = 48
    x2 = jax.random.normal(jax.random.PRNGKey(1), (S, B, D2), dtype=jnp.float32)
    pe2 = make_positional_encoding(D2, max_len=64)
    out2 = jax.block_until_ready(positional_encoding_forward(x2, pe2, training=False))
    assert jnp.allclose(out2, x2 + pe2[0], atol=1e-6), "lcm-fold-path mismatch vs reference"

    # Training mode: every element must be 0 (dropped) or (x + pe) / (1 - p) (kept & scaled).
    out_tr = jax.block_until_ready(
        positional_encoding_forward(x, pe, training=True, seed=123)
    )
    scaled_ref = ref / (1.0 - DROPOUT_P)
    ok = (out_tr == 0) | jnp.isclose(out_tr, scaled_ref, rtol=1e-5, atol=1e-6)
    assert bool(jnp.all(ok)), "training-mode dropout values inconsistent with keep/scale semantics"
    keep_frac = float(jnp.mean((out_tr != 0).astype(jnp.float32)))
    assert keep_frac > 0.5, f"dropout kept only {keep_frac:.2f} of elements (expected ~0.95)"

    print("KERNEL_OK")
</pallas_src>

<mosaic_0001>
module attributes {stable_mosaic.version = 11 : i64} {
  func.func @_add_pe_kernel(%arg0: i32, %arg1: memref<4x128xf32, #tpu.memory_space<vmem>>, %arg2: memref<1x128xf32, #tpu.memory_space<vmem>>, %arg3: memref<4x128xf32, #tpu.memory_space<vmem>>) attributes {dimension_semantics = [#tpu.dimension_semantics<parallel>], iteration_bounds = array<i64: 1>, scalar_prefetch = 0 : i64, scratch_operands = 0 : i64, tpu.core_type = #tpu.core_type<tc>, window_params = [{transform_indices = @transform_0, window_bounds = array<i64: 4, 128>}, {pipeline_mode = #tpu.pipeline_mode<synchronous>, transform_indices = @transform_1, window_bounds = array<i64: 1, 128>}, {transform_indices = @transform_2, window_bounds = array<i64: 4, 128>}]} {
    %c0 = arith.constant 0 : index
    %c0_0 = arith.constant 0 : index
    %0 = vector.load %arg1[%c0, %c0_0] : memref<4x128xf32, #tpu.memory_space<vmem>>, vector<4x128xf32>
    %c0_1 = arith.constant 0 : index
    %c0_2 = arith.constant 0 : index
    %1 = vector.load %arg2[%c0_1, %c0_2] : memref<1x128xf32, #tpu.memory_space<vmem>>, vector<1x128xf32>
    %2 = vector.broadcast %1 : vector<1x128xf32> to vector<4x128xf32>
    %3 = arith.addf %0, %2 : vector<4x128xf32>
    %c0_3 = arith.constant 0 : index
    %c0_4 = arith.constant 0 : index
    %4 = vector.load %arg3[%c0_3, %c0_4] : memref<4x128xf32, #tpu.memory_space<vmem>>, vector<4x128xf32>
    tpu.vector_store %arg3[%c0_3, %c0_4], %3 {strides = array<i32>} : memref<4x128xf32, #tpu.memory_space<vmem>>, vector<4x128xf32>,
    return
  }
  func.func @transform_0(%arg0: i32) -> (i32, i32) {
    %c0_i32 = arith.constant 0 : i32
    %c0_i32_0 = arith.constant 0 : i32
    return %arg0, %c0_i32 : i32, i32
  }
  func.func @transform_1(%arg0: i32) -> (i32, i32) {
    %c0_i32 = arith.constant 0 : i32
    %c0_i32_0 = arith.constant 0 : i32
    %c0_i32_1 = arith.constant 0 : i32
    return %c0_i32, %c0_i32_0 : i32, i32
  }
  func.func @transform_2(%arg0: i32) -> (i32, i32) {
    %c0_i32 = arith.constant 0 : i32
    %c0_i32_0 = arith.constant 0 : i32
    return %arg0, %c0_i32 : i32, i32
  }
}

</mosaic_0001>

<llo_original>
// kernel: tpu_custom_call.1
$region0: #{tpu_custom_call.1}
  #allocation0 [shape = 'u32[]', space=smem, size = 0x4, offset = 0x4, fixed_abs, tag = 'smem constant byte address 0x4 - core index']
  #allocation1 [shape = 'u32[144,128]{1,0:T(1,128)}', space=vmem, size = 0x12000, scoped, tag = 'internal scratch']
  %s0 = inlined_call_operand.hbm [shape: f32[4,128], index: 0, kind: input, shape index: {}]
  %s1 = inlined_call_operand.vmem [shape: f32[1,128], index: 1, kind: input, shape index: {}]
  %s2 = inlined_call_operand.hbm [shape: f32[4,128], index: 2, kind: output, shape index: {}]
  %s3 = sld [smem:[#allocation0]]
  $region22: #{tpu_custom_call.1} parent=0
    _
  %s5 = ssub.s32 1, %s3
  %s6 = scalar_select 0, %s5, %s3
  $region1: #{tpu_custom_call.1} parent=0
    #allocation2 [shape = 'u8[2048]{0}', space=vmem, size = 0x800, scoped, tag = 'input window, operand 0, single buffered']
    #allocation3 [shape = 's32[1]{0}', space=sflag, size = 0x4, scoped, tag = 'scoped memory for tpu_custom_call.1']
    #allocation4 [shape = 's32[1]{0}', space=sflag, size = 0x4, scoped, tag = 'scoped memory for tpu_custom_call.1']
    #allocation5 [shape = 'u8[2048]{0}', space=vmem, size = 0x800, scoped, tag = 'output window, operand 0, single buffered']
    %7 = vsyncpa [#allocation3], 0
    %8 = vsyncpa [#allocation4], 0
    // Predicated region
    $region2: #{tpu_custom_call.1} parent=1 // pred_check
      _
    $region3: #{tpu_custom_call.1} parent=1 // pred_check_branch
      %10 = sbr.rel (0) target = $region5
    $region4: #{tpu_custom_call.1} parent=1 // pred_region
      %s12 = ssub.s32 64, 64
      %13 = vsyncadd [#allocation3], %s12
      %s15 = sshll.u32 [#allocation2], 4
      %s16 = int_to_ptr.vmem [resolvable:$true] %s15
      %18 = dma.hbm_to_vmem [thread:$0]  %s0, 64, %s16, [#allocation3]
    $region5: #{tpu_custom_call.1} parent=1 // pred_fallthru
      _
    // Predicated region
    $region6: #{tpu_custom_call.1} parent=1 // pred_check
      _
    $region7: #{tpu_custom_call.1} parent=1 // pred_check_branch
      %20 = sbr.rel (0) target = $region9
    $region8: #{tpu_custom_call.1} parent=1 // pred_region
      _
    $region9: #{tpu_custom_call.1} parent=1 // pred_fallthru
      _
    // Predicated region
    $region10: #{tpu_custom_call.1} parent=1 // pred_check
      _
    $region11: #{tpu_custom_call.1} parent=1 // pred_check_branch
      %22 = sbr.rel (0) target = $region13
    $region12: #{tpu_custom_call.1} parent=1 // pred_region
      %23 = dma.done [#allocation3], 64
    $region13: #{tpu_custom_call.1} parent=1 // pred_fallthru
      _
    %v24 = vld [vmem:[#allocation2] sm:$0xf]
    %v25 = vld [vmem:[%s1] sm:$0x1]
    %v27 = vlaneseq
    %v28 = vshrl.u32 %v27, 7
    %v29 = vsub.s32 0, %v28
    %v30 = vrot.slane %v25, %v29
    %v32 = vadd.f32 %v24, %v30
    %33 = vst [vmem:[#allocation5] sm:$0xf] %v32
    // Predicated region
    $region14: #{tpu_custom_call.1} parent=1 // pred_check
      _
    $region15: #{tpu_custom_call.1} parent=1 // pred_check_branch
      %35 = sbr.rel (0) target = $region17
    $region16: #{tpu_custom_call.1} parent=1 // pred_region
      %s37 = ssub.s32 64, 64
      %38 = vsyncadd [#allocation4], %s37
      %s40 = sshll.u32 [#allocation5], 4
      %s41 = int_to_ptr.vmem [resolvable:$true] %s40
      %43 = dma.vmem_to_hbm [thread:$0]  %s41, 64, %s2, [#allocation4]
    $region17: #{tpu_custom_call.1} parent=1 // pred_fallthru
      _
    // Predicated region
    $region18: #{tpu_custom_call.1} parent=1 // pred_check
      _
    $region19: #{tpu_custom_call.1} parent=1 // pred_check_branch
      %45 = sbr.rel (0) target = $region21
    $region20: #{tpu_custom_call.1} parent=1 // pred_region
      %46 = dma.done [#allocation4], 64
    $region21: #{tpu_custom_call.1} parent=1 // pred_fallthru
      _
    %47 = vsyncpa [#allocation3], 1
    %48 = vsyncpa [#allocation4], 1

</llo_original>
